<compile_context>
chip_gen: v6e
topology: v6e:2x2x1
jax: 0.10.0
libtpu: 0.0.40
codegen_flags: <defaults>
</compile_context>

<pallas_src>
import functools

import jax
import jax.numpy as jnp
from jax.experimental import pallas as pl
from jax.experimental.pallas import tpu as pltpu


def _round_up(x: int, m: int) -> int:
    return ((x + m - 1) // m) * m


def _cdiv(a: int, b: int) -> int:
    return -(-a // b)


def _vmem_capacity_bytes() -> int:
    """Physical VMEM per TensorCore; conservative fallback if unqueryable."""
    try:
        cap = int(pltpu.get_tpu_info().vmem_capacity_bytes)
        if cap > 0:
            return cap
    except Exception:
        pass
    return 64 * 1024 * 1024  # v7x physical VMEM per TC (smallest of v5e/v6e/v7x)


def _lora_kernel(x_ref, bt_ref, at_ref, o_ref, xr_ref, *,
                 compute_dtype, tn, slice_at):
    # x_ref : [tm, in]        row tile (original dtype; cast here, not in wrapper)
    # bt_ref: [in, rank_p]    resident B^T (rank zero-padded)
    # at_ref: [rank_p, N_pad] resident A^T (slice_at=True) or [rank_p, tn] tile
    # o_ref : [tm, tn]        output tile
    # xr_ref: [tm, rank_p]    scratch (compute_dtype): x_tile @ B^T
    #
    # Invariant: grid axis 1 (N) is innermost and "arbitrary", so n == 0 runs
    # first for every row tile and xr_ref is valid for every later n.
    n = pl.program_id(1)

    @pl.when(n == 0)
    def _():
        xr = jnp.dot(x_ref[...].astype(compute_dtype), bt_ref[...],
                     preferred_element_type=jnp.float32)
        xr_ref[...] = xr.astype(xr_ref.dtype)

    if slice_at:
        at = at_ref[:, pl.ds(pl.multiple_of(n * tn, 128), tn)]
    else:
        at = at_ref[...]
    out = jnp.dot(xr_ref[...], at, preferred_element_type=jnp.float32)
    o_ref[...] = out.astype(o_ref.dtype)


def lora_forward(x, A, B, *, tm=None, tn=None, compute_dtype=None):
    """Pallas LoRA forward: returns x @ B.T @ A.T.

    x: [..., in_features], A: [out_features, rank], B: [rank, in_features].
    """
    in_features = x.shape[-1]
    out_features, rank = A.shape
    assert B.shape == (rank, in_features)
    lead = x.shape[:-1]
    out_dtype = x.dtype

    cdt = jnp.dtype(compute_dtype) if compute_dtype is not None else jnp.dtype(x.dtype)
    x_isize = jnp.dtype(x.dtype).itemsize
    out_isize = jnp.dtype(out_dtype).itemsize

    x2d = x.reshape(-1, in_features)      # layout-only; no dtype pass, no pad
    M = x2d.shape[0]

    # --- generation-aware sizing --------------------------------------------
    vmem_cap = _vmem_capacity_bytes()
    big_vmem = vmem_cap >= (100 << 20)    # v5e/v6e (128 MiB) vs v7x (64 MiB)
    tm_req = tm if tm is not None else (512 if big_vmem else 256)
    tn_req = tn if tn is not None else (1024 if big_vmem else 512)
    budget = int(vmem_cap * 0.55)         # headroom for Mosaic internal scratch

    # Pad rank to a sublane multiple of the compute dtype (zeros -> exact math).
    sub = 16 if cdt.itemsize == 2 else 8
    rank_p = _round_up(rank, sub)
    bt = B.T.astype(cdt)                  # [in_features, rank]    (small)
    at = A.T.astype(cdt)                  # [rank, out_features]   (small)
    if rank_p != rank:
        bt = jnp.pad(bt, ((0, 0), (0, rank_p - rank)))
        at = jnp.pad(at, ((0, rank_p - rank), (0, 0)))

    # N (out_features) tiling: lane-dense multiple-of-128 tiles for large
    # outputs; the full dim (legal full-extent block) for small ones.
    if out_features <= tn_req:
        tn_eff = out_features
        N_pad = out_features
    else:
        tn_eff = max(128, (tn_req // 128) * 128)
        N_pad = _round_up(out_features, tn_eff)
    grid_n = N_pad // tn_eff
    if N_pad != out_features:
        at = jnp.pad(at, ((0, 0), (0, N_pad - out_features)))  # tiny weight pad

    # A^T residency: keep the whole thing in VMEM (DMA'd once) unless huge.
    bt_bytes = in_features * rank_p * cdt.itemsize
    at_full_bytes = rank_p * N_pad * cdt.itemsize
    at_resident = (grid_n == 1) or (at_full_bytes <= max(budget // 4, 4 << 20))
    at_bytes = at_full_bytes if at_resident else 2 * rank_p * tn_eff * cdt.itemsize

    # Row tile: requested size, shrunk so (double-buffered x + outputs +
    # scratch + resident weights) fits the VMEM budget; never above ~M.
    per_row = (2 * in_features * x_isize        # x, double-buffered
               + 2 * tn_eff * out_isize         # output, double-buffered
               + rank_p * cdt.itemsize)         # xr scratch
    tm_fit = max(8, ((budget - bt_bytes - at_bytes) // max(per_row, 1)) // 8 * 8)
    tm_eff = max(8, min(tm_req, tm_fit, _round_up(M, 8)) // 8 * 8)
    # Small-M (decode): split into >=2 row tiles so the parallel M axis can be
    # sharded across v7x's two TensorCores (negligible cost on v5e/v6e).
    if M > 8 and _cdiv(M, tm_eff) == 1:
        tm_eff = _round_up(_cdiv(M, 2), 8)
    grid_m = _cdiv(M, tm_eff)

    slice_at = at_resident and grid_n > 1

    # --- block specs ----------------------------------------------------------
    x_spec = pl.BlockSpec((tm_eff, in_features), lambda m, n: (m, 0))
    bt_spec = pl.BlockSpec((in_features, rank_p), lambda m, n: (0, 0),
                           pipeline_mode=pl.Buffered(1))
    if at_resident:
        at_spec = pl.BlockSpec((rank_p, N_pad), lambda m, n: (0, 0),
                               pipeline_mode=pl.Buffered(1))
    else:
        at_spec = pl.BlockSpec((rank_p, tn_eff), lambda m, n: (0, n))
    out_spec = pl.BlockSpec((tm_eff, tn_eff), lambda m, n: (m, n))

    # Derived VMEM limit: actual buffer sum + headroom, capped below physical.
    need = (2 * tm_eff * in_features * x_isize + bt_bytes + at_bytes
            + 2 * tm_eff * tn_eff * out_isize + tm_eff * rank_p * cdt.itemsize)
    vmem_limit = int(min(vmem_cap * 0.9, max(need + (6 << 20), 32 << 20)))

    out2d = pl.pallas_call(
        functools.partial(_lora_kernel, compute_dtype=cdt, tn=tn_eff,
                          slice_at=slice_at),
        out_shape=jax.ShapeDtypeStruct((M, out_features), out_dtype),
        grid_spec=pltpu.PrefetchScalarGridSpec(
            num_scalar_prefetch=0,
            grid=(grid_m, grid_n),
            in_specs=[x_spec, bt_spec, at_spec],
            out_specs=out_spec,
            scratch_shapes=[pltpu.VMEM((tm_eff, rank_p), cdt)],
        ),
        compiler_params=pltpu.CompilerParams(
            # M axis parallel (megacore / v7x 2-TC sharding); N axis carries
            # the xr scratch dependency -> MUST stay innermost + arbitrary.
            dimension_semantics=("parallel", "arbitrary"),
            vmem_limit_bytes=vmem_limit,
        ),
    )(x2d, bt, at)

    return out2d.reshape(*lead, out_features)


if __name__ == "__main__":
    # Small shapes consistent with the module: batch=2, seq=8, hidden=32.
    batch, seq = 2, 8
    in_features, out_features, rank = 32, 16, 4

    key = jax.random.PRNGKey(0)
    kx, ka, kb = jax.random.split(key, 3)

    x = jax.random.normal(kx, (batch, seq, in_features), dtype=jnp.float32)

    # Deterministic init mirroring the module's __init__:
    #   A = randn(out_features, rank) * 0.02 ; B = zeros(rank, in_features)
    A = jax.random.normal(ka, (out_features, rank), dtype=jnp.float32) * 0.02
    B = jnp.zeros((rank, in_features), dtype=jnp.float32)

    out = jax.block_until_ready(lora_forward(x, A, B))
    ref = x @ B.T @ A.T
    assert out.shape == (batch, seq, out_features)
    assert jnp.allclose(out, ref, atol=1e-5)

    # Non-trivial (non-zero B) path, f32 compute.
    B_nz = jax.random.normal(kb, (rank, in_features), dtype=jnp.float32) * 0.02
    out_nz = jax.block_until_ready(lora_forward(x, A, B_nz))
    ref_nz = x @ B_nz.T @ A.T
    assert jnp.allclose(out_nz, ref_nz, atol=1e-5)

    # bf16 compute path (in-kernel cast, bf16 weights / MXU, f32 accum).
    out_bf16 = jax.block_until_ready(
        lora_forward(x, A, B_nz, compute_dtype=jnp.bfloat16))
    assert jnp.allclose(out_bf16, ref_nz, atol=2e-2, rtol=2e-2)

    # Multi-N-tile path: exercises resident A^T + in-kernel 128-aligned pl.ds
    # slicing and the 2-way row split (still tiny shapes).
    out_f2, rank2 = 384, 8
    A2 = jax.random.normal(ka, (out_f2, rank2), dtype=jnp.float32) * 0.02
    B2 = jax.random.normal(kb, (rank2, in_features), dtype=jnp.float32) * 0.02
    out2 = jax.block_until_ready(lora_forward(x, A2, B2, tn=128))
    ref2 = x @ B2.T @ A2.T
    assert out2.shape == (batch, seq, out_f2)
    assert jnp.allclose(out2, ref2, atol=1e-5)

    print("KERNEL_OK")
</pallas_src>

<mosaic_0001>
module attributes {stable_mosaic.version = 11 : i64} {
  func.func @_lora_kernel(%arg0: i32, %arg1: i32, %arg2: memref<8x32xf32, #tpu.memory_space<vmem>>, %arg3: memref<32x8xf32, #tpu.memory_space<vmem>>, %arg4: memref<8x16xf32, #tpu.memory_space<vmem>>, %arg5: memref<8x16xf32, #tpu.memory_space<vmem>>, %arg6: memref<8x8xf32, #tpu.memory_space<vmem>>) attributes {dimension_semantics = [#tpu.dimension_semantics<parallel>, #tpu.dimension_semantics<arbitrary>], iteration_bounds = array<i64: 2, 1>, scalar_prefetch = 0 : i64, scratch_operands = 1 : i64, tpu.core_type = #tpu.core_type<tc>, window_params = [{transform_indices = @transform_0, window_bounds = array<i64: 8, 32>}, {pipeline_mode = #tpu.pipeline_mode<synchronous>, transform_indices = @transform_1, window_bounds = array<i64: 32, 8>}, {pipeline_mode = #tpu.pipeline_mode<synchronous>, transform_indices = @transform_2, window_bounds = array<i64: 8, 16>}, {transform_indices = @transform_3, window_bounds = array<i64: 8, 16>}]} {
    %c0_i32 = arith.constant 0 : i32
    %0 = arith.cmpi eq, %arg1, %c0_i32 : i32
    %1 = arith.extui %0 : i1 to i32
    %c0_i32_0 = arith.constant 0 : i32
    %2 = arith.cmpi ne, %1, %c0_i32_0 : i32
    scf.if %2 {
      %c0_6 = arith.constant 0 : index
      %c0_7 = arith.constant 0 : index
      %7 = vector.load %arg2[%c0_6, %c0_7] : memref<8x32xf32, #tpu.memory_space<vmem>>, vector<8x32xf32>
      %c0_8 = arith.constant 0 : index
      %c0_9 = arith.constant 0 : index
      %8 = vector.load %arg3[%c0_8, %c0_9] : memref<32x8xf32, #tpu.memory_space<vmem>>, vector<32x8xf32>
      %cst_10 = arith.constant dense<0.000000e+00> : vector<8x8xf32>
      %9 = tpu.matmul %7, %8, %cst_10 {dimension_numbers = #tpu.dot_dimension_numbers<[1], [0], [0], [1], [0, 0, 1, 1], [], []>} : vector<8x32xf32>, vector<32x8xf32>, vector<8x8xf32> -> vector<8x8xf32>
      %c0_11 = arith.constant 0 : index
      %c0_12 = arith.constant 0 : index
      %10 = vector.load %arg6[%c0_11, %c0_12] : memref<8x8xf32, #tpu.memory_space<vmem>>, vector<8x8xf32>
      tpu.vector_store %arg6[%c0_11, %c0_12], %9 {strides = array<i32>} : memref<8x8xf32, #tpu.memory_space<vmem>>, vector<8x8xf32>,
    } else {
    }
    %c0 = arith.constant 0 : index
    %c0_1 = arith.constant 0 : index
    %3 = vector.load %arg4[%c0, %c0_1] : memref<8x16xf32, #tpu.memory_space<vmem>>, vector<8x16xf32>
    %c0_2 = arith.constant 0 : index
    %c0_3 = arith.constant 0 : index
    %4 = vector.load %arg6[%c0_2, %c0_3] : memref<8x8xf32, #tpu.memory_space<vmem>>, vector<8x8xf32>
    %cst = arith.constant dense<0.000000e+00> : vector<8x16xf32>
    %5 = tpu.matmul %4, %3, %cst {dimension_numbers = #tpu.dot_dimension_numbers<[1], [0], [0], [1], [0, 0, 1, 1], [], []>} : vector<8x8xf32>, vector<8x16xf32>, vector<8x16xf32> -> vector<8x16xf32>
    %c0_4 = arith.constant 0 : index
    %c0_5 = arith.constant 0 : index
    %6 = vector.load %arg5[%c0_4, %c0_5] : memref<8x16xf32, #tpu.memory_space<vmem>>, vector<8x16xf32>
    tpu.vector_store %arg5[%c0_4, %c0_5], %5 {strides = array<i32>} : memref<8x16xf32, #tpu.memory_space<vmem>>, vector<8x16xf32>,
    return
  }
  func.func @transform_0(%arg0: i32, %arg1: i32) -> (i32, i32) {
    %c0_i32 = arith.constant 0 : i32
    %c0_i32_0 = arith.constant 0 : i32
    return %arg0, %c0_i32 : i32, i32
  }
  func.func @transform_1(%arg0: i32, %arg1: i32) -> (i32, i32) {
    %c0_i32 = arith.constant 0 : i32
    %c0_i32_0 = arith.constant 0 : i32
    %c0_i32_1 = arith.constant 0 : i32
    return %c0_i32, %c0_i32_0 : i32, i32
  }
  func.func @transform_2(%arg0: i32, %arg1: i32) -> (i32, i32) {
    %c0_i32 = arith.constant 0 : i32
    %c0_i32_0 = arith.constant 0 : i32
    %c0_i32_1 = arith.constant 0 : i32
    return %c0_i32, %c0_i32_0 : i32, i32
  }
  func.func @transform_3(%arg0: i32, %arg1: i32) -> (i32, i32) {
    %c0_i32 = arith.constant 0 : i32
    return %arg0, %arg1 : i32, i32
  }
}

</mosaic_0001>

<llo_original>
// kernel: tpu_custom_call.1
$region0: #{tpu_custom_call.1}
  #allocation0 [shape = 'u32[]', space=smem, size = 0x4, offset = 0x4, fixed_abs, tag = 'smem constant byte address 0x4 - core index']
  #allocation1 [shape = 'u32[144,128]{1,0:T(1,128)}', space=vmem, size = 0x12000, scoped, tag = 'internal scratch']
  #allocation2 [shape = 'f32[8,8]{1,0:T(8,128)}', space=vmem, size = 0x1000, scoped, tag = 'scratch operand']
  %s0 = inlined_call_operand.vmem [shape: f32[16,32], index: 0, kind: input, shape index: {}]
  %s1 = inlined_call_operand.vmem [shape: f32[32,8], index: 1, kind: input, shape index: {}]
  %s2 = inlined_call_operand.vmem [shape: f32[8,16], index: 2, kind: input, shape index: {}]
  %s3 = inlined_call_operand.hbm [shape: f32[16,16], index: 3, kind: output, shape index: {}]
  %s4 = sld [smem:[#allocation0]]
  $region49: #{tpu_custom_call.1} parent=0
    _
  %s6 = ssub.s32 1, %s4
  %s7 = scalar_select 0, %s6, %s4
  $region1: #{tpu_custom_call.1} parent=0
    #allocation3 [shape = 'u8[8192]{0}', space=vmem, size = 0x2000, scoped, tag = 'output window, operand 0']
    #allocation4 [shape = 's32[2]{0}', space=sflag, size = 0x8, scoped, tag = 'scoped memory for tpu_custom_call.1']
    %8 = vsyncpa [#allocation4], 0
    %s9 = scalar_lea.sflag [#allocation4], 1
    %10 = vsyncpa %s9, 0
    loop: start=0, step=1, limit=4
    $region2: #{tpu_custom_call.1} parent=1 // loop_pre_header
      _
    $region3: #{tpu_custom_call.1} parent=1 // loop_header
      %s12 = sphi 0, %s16
      %p13 = scmp.ge.s32.totalorder %s12, 4
      %s19 = sphi 0, %s31
      %s20 = sphi 0, %s27
      %s21 = sphi 0, %s19
      %s22 = sphi 0, %s20
      %s23 = sphi 0, %s21
      %s24 = sphi 0, %s22
      %s34 = sphi 0, %s36
      %s37 = sphi 0, %s34
      %s38 = sphi 0, %s37
      %s54 = sphi 0, %s38
      %s58 = sphi 0, %s58
      %s60 = sphi 0, %s58
      %s61 = sphi 0, %s60
      %s75 = sphi 0, %s61
      %s79 = sphi 0, %s79
      %s81 = sphi 0, %s79
      %s82 = sphi 0, %s81
      %s96 = sphi 0, %s82
      %s104 = sphi 0, %s106
      %s107 = sphi 0, %s104
      %s108 = sphi 0, %s107
      %s124 = sphi 0, %s108
    $region4: #{tpu_custom_call.1} parent=1 // loop_header_branch
      %15 = sbr.rel (%p13) target = $region8
    $region5: #{tpu_custom_call.1} parent=1 // loop_body
      %s17 = ssub.s32 %s12, 1
      %s18 = ssub.s32 %s12, 2
      %s25 = sadd.s32 1, %s20
      %p26 = scmp.ge.s32.totalorder %s25, 1
      %s27 = scalar_select %p26, 0, %s25
      %s28 = sadd.s32 1, %s19
      %s29 = scalar_select %p26, %s28, %s19
      %p30 = scmp.ge.s32.totalorder %s29, 2
      %s31 = scalar_select %p30, 0, %s29
      %s32 = ssub.s32 %s19, %s31
      %p33 = scmp.eq.s32.totalorder %s32, 0
      %s35 = sadd.s32 %s34, 1
      %s36 = scalar_select %p33, %s34, %s35
      %p39 = pneg %p33
      %p40 = scmp.eq.s32.totalorder %s12, 1
      %p41 = por %p39, %p40
      %p42 = scmp.ne.s32.totalorder %s34, %s37
      %p43 = scmp.eq.s32.totalorder %s12, 0
      %p44 = por %p42, %p43
      %p45 = scmp.ne.s32.totalorder %s34, %s37
      %p46 = scmp.eq.s32.totalorder %s17, 1
      %p47 = por %p45, %p46
      %p48 = scmp.ne.s32.totalorder %s37, %s38
      %p49 = scmp.eq.s32.totalorder %s17, 0
      %p50 = por %p48, %p49
      %p51 = scmp.ne.s32.totalorder %s37, %s38
      %p52 = scmp.eq.s32.totalorder %s18, 1
      %p53 = por %p51, %p52
      %p55 = scmp.ne.s32.totalorder %s38, %s54
      %p56 = scmp.eq.s32.totalorder %s18, 0
      %p57 = por %p55, %p56
      %s59 = sadd.s32 %s58, 1
      %p62 = scmp.eq.s32.totalorder %s12, 1
      %p63 = scmp.ne.s32.totalorder %s58, %s60
      %p64 = scmp.eq.s32.totalorder %s12, 0
      %p65 = por %p63, %p64
      %p66 = scmp.ne.s32.totalorder %s58, %s60
      %p67 = scmp.eq.s32.totalorder %s17, 1
      %p68 = por %p66, %p67
      %p69 = scmp.ne.s32.totalorder %s60, %s61
      %p70 = scmp.eq.s32.totalorder %s17, 0
      %p71 = por %p69, %p70
      %p72 = scmp.ne.s32.totalorder %s60, %s61
      %p73 = scmp.eq.s32.totalorder %s18, 1
      %p74 = por %p72, %p73
      %p76 = scmp.ne.s32.totalorder %s61, %s75
      %p77 = scmp.eq.s32.totalorder %s18, 0
      %p78 = por %p76, %p77
      %s80 = sadd.s32 %s79, 1
      %p83 = scmp.eq.s32.totalorder %s12, 1
      %p84 = scmp.ne.s32.totalorder %s79, %s81
      %p85 = scmp.eq.s32.totalorder %s12, 0
      %p86 = por %p84, %p85
      %p87 = scmp.ne.s32.totalorder %s79, %s81
      %p88 = scmp.eq.s32.totalorder %s17, 1
      %p89 = por %p87, %p88
      %p90 = scmp.ne.s32.totalorder %s81, %s82
      %p91 = scmp.eq.s32.totalorder %s17, 0
      %p92 = por %p90, %p91
      %p93 = scmp.ne.s32.totalorder %s81, %s82
      %p94 = scmp.eq.s32.totalorder %s18, 1
      %p95 = por %p93, %p94
      %p97 = scmp.ne.s32.totalorder %s82, %s96
      %p98 = scmp.eq.s32.totalorder %s18, 0
      %p99 = por %p97, %p98
      %s100 = ssub.s32 %s19, %s31
      %s101 = ssub.s32 %s20, %s27
      %s102 = sor.u32 %s100, %s101
      %p103 = scmp.eq.s32.totalorder %s102, 0
      %s105 = sadd.s32 %s104, 1
      %s106 = scalar_select %p103, %s104, %s105
      %p109 = pneg %p103
      %p110 = scmp.eq.s32.totalorder %s12, 1
      %p111 = por %p109, %p110
      %p112 = scmp.ne.s32.totalorder %s104, %s107
      %p113 = scmp.eq.s32.totalorder %s12, 0
      %p114 = por %p112, %p113
      %p115 = scmp.ne.s32.totalorder %s104, %s107
      %p116 = scmp.eq.s32.totalorder %s17, 1
      %p117 = por %p115, %p116
      %p118 = scmp.ne.s32.totalorder %s107, %s108
      %p119 = scmp.eq.s32.totalorder %s17, 0
      %p120 = por %p118, %p119
      %p121 = scmp.ne.s32.totalorder %s107, %s108
      %p122 = scmp.eq.s32.totalorder %s18, 1
      %p123 = por %p121, %p122
      %p125 = scmp.ne.s32.totalorder %s108, %s124
      %p126 = scmp.eq.s32.totalorder %s18, 0
      %p127 = por %p125, %p126
      %p128 = scmp.le.s32.totalorder 1, %s12
      %p129 = scmp.lt.s32.totalorder %s12, 3
      %p130 = pnand %p128, %p129
      %p131 = pneg %p130
      // Predicated region
      $region9: #{tpu_custom_call.1} parent=5 // pred_check
        _
      $region10: #{tpu_custom_call.1} parent=5 // pred_check_branch
        %133 = sbr.rel (%p130) target = $region12
      $region11: #{tpu_custom_call.1} parent=5 // pred_region
        %s134 = ssub.s32 %s12, 1
        // Predicated region
        $region13: #{tpu_custom_call.1} parent=11 // pred_check
          %p135 = pneg %p71
        $region14: #{tpu_custom_call.1} parent=11 // pred_check_branch
          %137 = sbr.rel (%p135) target = $region16
        $region15: #{tpu_custom_call.1} parent=11 // pred_region
          _
        $region16: #{tpu_custom_call.1} parent=11 // pred_fallthru
          _
        // Predicated region
        $region17: #{tpu_custom_call.1} parent=11 // pred_check
          %p138 = pneg %p92
        $region18: #{tpu_custom_call.1} parent=11 // pred_check_branch
          %140 = sbr.rel (%p138) target = $region20
        $region19: #{tpu_custom_call.1} parent=11 // pred_region
          _
        $region20: #{tpu_custom_call.1} parent=11 // pred_fallthru
          _
      $region12: #{tpu_custom_call.1} parent=5 // pred_fallthru
        _
      %p141 = scmp.lt.s32.totalorder %s12, 2
      // Predicated region
      $region21: #{tpu_custom_call.1} parent=5 // pred_check
        %p142 = pneg %p141
      $region22: #{tpu_custom_call.1} parent=5 // pred_check_branch
        %144 = sbr.rel (%p142) target = $region24
      $region23: #{tpu_custom_call.1} parent=5 // pred_region
        // Predicated region
        $region25: #{tpu_custom_call.1} parent=23 // pred_check
          %p145 = pneg %p44
        $region26: #{tpu_custom_call.1} parent=23 // pred_check_branch
          %147 = sbr.rel (%p145) target = $region28
        $region27: #{tpu_custom_call.1} parent=23 // pred_region
          %p148 = scmp.lt.s32.totalorder %s19, 1
          %s149 = scalar_select %p148, %s19, 1
          %s150 = smul.addr %s149, 8
          %s151 = scalar_lea.vmem %s0, %s150
        $region28: #{tpu_custom_call.1} parent=23 // pred_fallthru
          _
      $region24: #{tpu_custom_call.1} parent=5 // pred_fallthru
        _
      %p152 = scmp.le.s32.totalorder 1, %s12
      %p153 = scmp.lt.s32.totalorder %s12, 3
      %p154 = pnand %p152, %p153
      %p155 = pneg %p154
      // Predicated region
      $region29: #{tpu_custom_call.1} parent=5 // pred_check
        _
      $region30: #{tpu_custom_call.1} parent=5 // pred_check_branch
        %157 = sbr.rel (%p154) target = $region32
      $region31: #{tpu_custom_call.1} parent=5 // pred_region
        %s158 = ssub.s32 %s12, 1
        %p159 = scmp.lt.s32.totalorder %s21, 1
        %s160 = scalar_select %p159, %s21, 1
        %s161 = smul.addr %s160, 8
        %s162 = scalar_lea.vmem %s0, %s161
        %p163 = pneg %p50
        %p164 = pneg %p47
        %p165 = pneg %p71
        %p166 = pneg %p68
        %p167 = pneg %p92
        %p168 = pneg %p89
        %p169 = pneg %p120
        %p170 = pneg %p117
        %s171 = sand.u32 %s107, 1
        %s172 = scalar_lea.sflag [#allocation4], %s171
        %s173 = sand.u32 %s107, 1
        %s174 = smul.addr %s173, 8
        %s175 = scalar_lea.vmem [#allocation3], %s174
        %p176 = scmp.lt.s32.totalorder %s21, 1
        %s177 = scalar_select %p176, %s21, 1
        %s178 = smul.addr %s177, 8
        %s179 = scalar_lea.vmem %s0, %s178
        %p180 = scmp.eq.s32.totalorder %s22, 0
        // Predicated region
        $region33: #{tpu_custom_call.1} parent=31 // pred_check
          %p181 = pneg %p180
        $region34: #{tpu_custom_call.1} parent=31 // pred_check_branch
          %183 = sbr.rel (%p181) target = $region36
        $region35: #{tpu_custom_call.1} parent=31 // pred_region
          %v184 = vld [vmem:[%s179] sm:$0xff]
          %v185 = vld [vmem:[%s1] sm:$0xff]
          %v186 = vld [vmem:[%s1 + $0x8] sm:$0xff]
          %v187 = vld [vmem:[%s1 + $0x10] sm:$0xff]
          %v188 = vld [vmem:[%s1 + $0x18] sm:$0xff]
          %vm189 = vcmask 261120
          %v191 = vsel %vm189, %v184, 0
          %193 = vmatprep.subr.mxu0 0.0
          %194 = vmatpush1.msra.mxu0 0.0
          %195 = vmatprep.subr.mxu0 0.0
          %196 = vmatpush1.msra.mxu0 0.0
          %197 = vmatprep.subr.mxu0 0.0
          %198 = vmatpush1.msra.mxu0 0.0
          %199 = vmatprep.subr.mxu0 0.0
          %200 = vmatpush1.msra.mxu0 0.0
          %201 = vmatprep.subr.mxu0 0.0
          %202 = vmatpush1.msra.mxu0 0.0
          %203 = vmatprep.subr.mxu0 0.0
          %204 = vmatpush1.msra.mxu0 0.0
          %205 = vmatprep.subr.mxu0 0.0
          %206 = vmatpush1.msra.mxu0 0.0
          %207 = vmatprep.subr.mxu0 0.0
          %208 = vmatpush1.msra.mxu0 0.0
          %209 = vmatprep.subr.mxu0 0.0
          %210 = vmatpush1.msra.mxu0 0.0
          %211 = vmatprep.subr.mxu0 0.0
          %212 = vmatpush1.msra.mxu0 0.0
          %213 = vmatprep.subr.mxu0 0.0
          %214 = vmatpush1.msra.mxu0 0.0
          %215 = vmatprep.subr.mxu0 0.0
          %216 = vmatpush1.msra.mxu0 0.0
          %217 = vmatprep.subr.mxu0 0.0
          %218 = vmatpush1.msra.mxu0 %v188
          %219 = vmatprep.subr.mxu0 0.0
          %220 = vmatpush1.msra.mxu0 %v187
          %221 = vmatprep.subr.mxu0 0.0
          %222 = vmatpush1.msra.mxu0 %v186
          %223 = vmatprep.subr.mxu0 0.0
          %224 = vmatpush1.msra.mxu0 %v185
          %225 = vmatprep.subr.mxu0 0.0
          %226 = vmatpush2.msra.mxu0 0.0
          %227 = vmatprep.subr.mxu0 0.0
          %228 = vmatpush2.msra.mxu0 0.0
          %229 = vmatprep.subr.mxu0 0.0
          %230 = vmatpush2.msra.mxu0 0.0
          %231 = vmatprep.subr.mxu0 0.0
          %232 = vmatpush2.msra.mxu0 0.0
          %233 = vmatprep.subr.mxu0 0.0
          %234 = vmatpush2.msra.mxu0 0.0
          %235 = vmatprep.subr.mxu0 0.0
          %236 = vmatpush2.msra.mxu0 0.0
          %237 = vmatprep.subr.mxu0 0.0
          %238 = vmatpush2.msra.mxu0 0.0
          %239 = vmatprep.subr.mxu0 0.0
          %240 = vmatpush2.msra.mxu0 0.0
          %241 = vmatprep.subr.mxu0 0.0
          %242 = vmatpush2.msra.mxu0 0.0
          %243 = vmatprep.subr.mxu0 0.0
          %244 = vmatpush2.msra.mxu0 0.0
          %245 = vmatprep.subr.mxu0 0.0
          %246 = vmatpush2.msra.mxu0 0.0
          %247 = vmatprep.subr.mxu0 0.0
          %248 = vmatpush2.msra.mxu0 0.0
          %249 = vmatprep.subr.mxu0 0.0
          %250 = vmatpush2.msra.mxu0 0.0
          %251 = vmatprep.subr.mxu0 0.0
          %252 = vmatpush2.msra.mxu0 0.0
          %253 = vmatprep.subr.mxu0 0.0
          %254 = vmatpush2.msra.mxu0 0.0
          %255 = vmatprep.subr.mxu0 0.0
          %256 = vmatpush2.msra.mxu0 0.0
          %257 = vmatprep.mubr.f32.mxu0 0.0
          %258 = vmatmul.mubr.f32.gmra.mxu0 %v191
          %v259 = vpop.f32.mrf.mxu0
          %v260 = vadd.f32 0.0, %v259
          %v261 = vpop.f32.mrf.mxu0
          %262 = vdwg.mxu0
          %vm263 = vcmask 64512
          %264 = vst.msk [vmem:[#allocation2] sm:$0xff] %vm263, %v260
        $region36: #{tpu_custom_call.1} parent=31 // pred_fallthru
          _
        %v265 = vld [vmem:[%s2] sm:$0xff]
        %v266 = vld [vmem:[#allocation2] sm:$0xff]
        %vm267 = vcmask 64512
        %v269 = vsel %vm267, %v266, 0
        %271 = vmatprep.subr.mxu0 0.0
        %272 = vmatpush1.msra.mxu0 0.0
        %273 = vmatprep.subr.mxu0 0.0
        %274 = vmatpush1.msra.mxu0 0.0
        %275 = vmatprep.subr.mxu0 0.0
        %276 = vmatpush1.msra.mxu0 0.0
        %277 = vmatprep.subr.mxu0 0.0
        %278 = vmatpush1.msra.mxu0 0.0
        %279 = vmatprep.subr.mxu0 0.0
        %280 = vmatpush1.msra.mxu0 0.0
        %281 = vmatprep.subr.mxu0 0.0
        %282 = vmatpush1.msra.mxu0 0.0
        %283 = vmatprep.subr.mxu0 0.0
        %284 = vmatpush1.msra.mxu0 0.0
        %285 = vmatprep.subr.mxu0 0.0
        %286 = vmatpush1.msra.mxu0 0.0
        %287 = vmatprep.subr.mxu0 0.0
        %288 = vmatpush1.msra.mxu0 0.0
        %289 = vmatprep.subr.mxu0 0.0
        %290 = vmatpush1.msra.mxu0 0.0
        %291 = vmatprep.subr.mxu0 0.0
        %292 = vmatpush1.msra.mxu0 0.0
        %293 = vmatprep.subr.mxu0 0.0
        %294 = vmatpush1.msra.mxu0 0.0
        %295 = vmatprep.subr.mxu0 0.0
        %296 = vmatpush1.msra.mxu0 0.0
        %297 = vmatprep.subr.mxu0 0.0
        %298 = vmatpush1.msra.mxu0 0.0
        %299 = vmatprep.subr.mxu0 0.0
        %300 = vmatpush1.msra.mxu0 0.0
        %301 = vmatprep.subr.mxu0 0.0
        %302 = vmatpush1.msra.mxu0 %v265
        %303 = vmatprep.subr.mxu0 0.0
        %304 = vmatpush2.msra.mxu0 0.0
        %305 = vmatprep.subr.mxu0 0.0
        %306 = vmatpush2.msra.mxu0 0.0
        %307 = vmatprep.subr.mxu0 0.0
        %308 = vmatpush2.msra.mxu0 0.0
        %309 = vmatprep.subr.mxu0 0.0
        %310 = vmatpush2.msra.mxu0 0.0
        %311 = vmatprep.subr.mxu0 0.0
        %312 = vmatpush2.msra.mxu0 0.0
        %313 = vmatprep.subr.mxu0 0.0
        %314 = vmatpush2.msra.mxu0 0.0
        %315 = vmatprep.subr.mxu0 0.0
        %316 = vmatpush2.msra.mxu0 0.0
        %317 = vmatprep.subr.mxu0 0.0
        %318 = vmatpush2.msra.mxu0 0.0
        %319 = vmatprep.subr.mxu0 0.0
        %320 = vmatpush2.msra.mxu0 0.0
        %321 = vmatprep.subr.mxu0 0.0
        %322 = vmatpush2.msra.mxu0 0.0
        %323 = vmatprep.subr.mxu0 0.0
        %324 = vmatpush2.msra.mxu0 0.0
        %325 = vmatprep.subr.mxu0 0.0
        %326 = vmatpush2.msra.mxu0 0.0
        %327 = vmatprep.subr.mxu0 0.0
        %328 = vmatpush2.msra.mxu0 0.0
        %329 = vmatprep.subr.mxu0 0.0
        %330 = vmatpush2.msra.mxu0 0.0
        %331 = vmatprep.subr.mxu0 0.0
        %332 = vmatpush2.msra.mxu0 0.0
        %333 = vmatprep.subr.mxu0 0.0
        %334 = vmatpush2.msra.mxu0 0.0
        %335 = vmatprep.mubr.f32.mxu0 0.0
        %336 = vmatmul.mubr.f32.gmra.mxu0 %v269
        %v337 = vpop.f32.mrf.mxu0
        %v338 = vadd.f32 0.0, %v337
        %v339 = vpop.f32.mrf.mxu0
        %340 = vdwg.mxu0
        %vm341 = vcmask 130048
        %342 = vst.msk [vmem:[%s175] sm:$0xff] %vm341, %v338
        %s343 = sand.u32 %s107, 1
        %s344 = scalar_lea.sflag [#allocation4], %s343
        %s345 = sand.u32 %s107, 1
        %s346 = smul.addr %s345, 8
        %s347 = scalar_lea.vmem [#allocation3], %s346
        // Predicated region
        $region37: #{tpu_custom_call.1} parent=31 // pred_check
          %p348 = pneg %p117
        $region38: #{tpu_custom_call.1} parent=31 // pred_check_branch
          %350 = sbr.rel (%p348) target = $region40
        $region39: #{tpu_custom_call.1} parent=31 // pred_region
          %s352 = ssub.s32 128, 128
          %353 = vsyncadd %s344, %s352
          %s354 = sadd.s32 %s22, %s21
          %s355 = smul.addr %s354, 128
          %s356 = scalar_lea.hbm %s3, %s355
          %s358 = sshll.u32 %s347, 4
          %s359 = int_to_ptr.vmem [resolvable:$true] %s358
          %361 = dma.vmem_to_hbm [thread:$0]  %s359, 128, %s356, %s344
        $region40: #{tpu_custom_call.1} parent=31 // pred_fallthru
          _
      $region32: #{tpu_custom_call.1} parent=5 // pred_fallthru
        _
      %p362 = scmp.le.s32.totalorder 2, %s12
      // Predicated region
      $region41: #{tpu_custom_call.1} parent=5 // pred_check
        %p363 = pneg %p362
      $region42: #{tpu_custom_call.1} parent=5 // pred_check_branch
        %365 = sbr.rel (%p363) target = $region44
      $region43: #{tpu_custom_call.1} parent=5 // pred_region
        %s366 = ssub.s32 %s12, 2
        // Predicated region
        $region45: #{tpu_custom_call.1} parent=43 // pred_check
          %p367 = pneg %p123
        $region46: #{tpu_custom_call.1} parent=43 // pred_check_branch
          %369 = sbr.rel (%p367) target = $region48
        $region47: #{tpu_custom_call.1} parent=43 // pred_region
          %s370 = sand.u32 %s108, 1
          %s371 = scalar_lea.sflag [#allocation4], %s370
          %s372 = sand.u32 %s108, 1
          %s373 = smul.addr %s372, 8
          %s374 = scalar_lea.vmem [#allocation3], %s373
          %375 = dma.done %s371, 128
        $region48: #{tpu_custom_call.1} parent=43 // pred_fallthru
          _
      $region44: #{tpu_custom_call.1} parent=5 // pred_fallthru
        _
    $region6: #{tpu_custom_call.1} parent=1 // loop_footer
      %s16 = sadd.s32 1, %s12
    $region7: #{tpu_custom_call.1} parent=1 // loop_footer_branch
      %11 = sbr.rel target = $region3
    $region8: #{tpu_custom_call.1} parent=1 // loop_exit
      _
    %376 = vsyncpa [#allocation4], 1
    %s377 = scalar_lea.sflag [#allocation4], 1
    %378 = vsyncpa %s377, 1

</llo_original>
